<compile_context>
chip_gen: v7x
topology: tpu7x:2x2x1
jax: 0.10.0
libtpu: 0.0.40
codegen_flags: <defaults>
</compile_context>

<pallas_src>
import jax
import jax.numpy as jnp
from jax.experimental import pallas as pl
from jax.experimental.pallas import tpu as pltpu

LANE = 128   # lane width / MXU-friendly padding unit for the hidden dim


def _round_up(v, m):
    return ((v + m - 1) // m) * m


def _mlp_kernel(x_ref, w1_ref, b1_ref, w2_ref, b2_ref, o_ref):
    # x_ref : [TB, IN] f32/bf16   w1_ref: [IN, H_P] bf16   b1_ref: [1, H_P] f32
    # w2_ref: [H_P, O] bf16       b2_ref: [1, O]    f32    o_ref : [TB, O]  f32
    x = x_ref[...].astype(jnp.bfloat16)
    h = jnp.dot(x, w1_ref[...], preferred_element_type=jnp.float32)
    h = jnp.maximum(h + b1_ref[...], 0.0)                      # bias + ReLU in f32
    y = jnp.dot(h.astype(jnp.bfloat16), w2_ref[...],
                preferred_element_type=jnp.float32)
    o_ref[...] = (y + b2_ref[...]).astype(o_ref.dtype)


def prepare_neuron_params(w1, b1, w2, b2):
    """One-time prep: transpose nn.Linear [out, in] weights to [in, out], pad
    only the hidden dim to a lane multiple, cast matmul operands to bf16.
    IN and O stay unpadded, so the hot path has no x pre-pad and no output
    un-pad slice."""
    H, IN = w1.shape
    O = w2.shape[0]
    H_P = _round_up(H, LANE)

    w1_t = jnp.zeros((IN, H_P), jnp.float32).at[:, :H].set(
        jnp.asarray(w1.T, jnp.float32))
    w2_t = jnp.zeros((H_P, O), jnp.float32).at[:H, :].set(
        jnp.asarray(w2.T, jnp.float32))
    b1_p = jnp.zeros((1, H_P), jnp.float32).at[0, :H].set(
        jnp.asarray(b1, jnp.float32))
    b2_p = jnp.reshape(jnp.asarray(b2, jnp.float32), (1, O))

    return (w1_t.astype(jnp.bfloat16), b1_p, w2_t.astype(jnp.bfloat16), b2_p)


@jax.jit
def _neuron_forward_impl(x, w1_t, b1_p, w2_t, b2_p):
    B, IN = x.shape                 # static under jit
    H_P = w1_t.shape[1]
    O = w2_t.shape[1]

    # Batch tile: single grid step for small batches; 256-row tiles at scale
    # so the v7x megacore gets >=2 tiles per core and per-core pipelining.
    if B <= 512:
        TB = _round_up(B, 8)
    else:
        TB = 256
    B_P = _round_up(B, TB)

    if B_P != B:
        # Batch-remainder pad only; cast to bf16 first to halve pad-pass bytes.
        x_in = jnp.pad(x.astype(jnp.bfloat16), ((0, B_P - B), (0, 0)))
    else:
        x_in = x   # no wrapper pre-pass at all; the kernel casts the tile.

    grid = (B_P // TB,)

    flops = 2 * B_P * (IN * H_P + H_P * O)
    bytes_accessed = (B_P * IN * x_in.dtype.itemsize + w1_t.size * 2
                      + w2_t.size * 2 + b1_p.size * 4 + b2_p.size * 4
                      + B_P * O * 4)

    # NOTE(v7x): for large layers add pipeline_mode=pl.Buffered(1) to the
    # constant-index weight/bias specs to single-buffer them (64 MiB VMEM);
    # irrelevant at these sizes.
    out = pl.pallas_call(
        _mlp_kernel,
        out_shape=jax.ShapeDtypeStruct((B_P, O), jnp.float32),
        grid=grid,
        in_specs=[
            pl.BlockSpec((TB, IN), lambda i: (i, 0)),      # streamed per tile
            pl.BlockSpec((IN, H_P), lambda i: (0, 0)),     # resident weights
            pl.BlockSpec((1, H_P), lambda i: (0, 0)),
            pl.BlockSpec((H_P, O), lambda i: (0, 0)),
            pl.BlockSpec((1, O), lambda i: (0, 0)),
        ],
        out_specs=pl.BlockSpec((TB, O), lambda i: (i, 0)),  # unpadded-O writeback
        compiler_params=pltpu.CompilerParams(
            dimension_semantics=("parallel",),              # megacore shard on v7x
            vmem_limit_bytes=32 * 1024 * 1024,
        ),
        cost_estimate=pl.CostEstimate(
            flops=flops, transcendentals=0, bytes_accessed=bytes_accessed),
    )(x_in, w1_t, b1_p, w2_t, b2_p)

    return out if B_P == B else out[:B]


def neuron_forward(x, params):
    """Fused Linear -> ReLU -> Linear as one batch-tiled Pallas call."""
    w1_t, b1_p, w2_t, b2_p = params
    return _neuron_forward_impl(x, w1_t, b1_p, w2_t, b2_p)


def _reference(x, w1, b1, w2, b2):
    h = jnp.maximum(x @ w1.T + b1, 0.0)
    return h @ w2.T + b2


if __name__ == "__main__":
    key = jax.random.PRNGKey(0)
    kx, k1, kb1, k2, kb2 = jax.random.split(key, 5)

    B, IN, H, O = 256, 32, 64, 16

    x = jax.random.normal(kx, (B, IN), dtype=jnp.float32)
    # PyTorch nn.Linear-style parameters (weight is [out, in]).
    w1 = jax.random.uniform(k1, (H, IN), jnp.float32, -1.0, 1.0) / jnp.sqrt(IN)
    b1 = jax.random.uniform(kb1, (H,), jnp.float32, -1.0, 1.0) / jnp.sqrt(IN)
    w2 = jax.random.uniform(k2, (O, H), jnp.float32, -1.0, 1.0) / jnp.sqrt(H)
    b2 = jax.random.uniform(kb2, (O,), jnp.float32, -1.0, 1.0) / jnp.sqrt(H)

    # One-time parameter prep (transpose / pad / bf16 cast) hoisted out of the
    # per-call path.
    params = prepare_neuron_params(w1, b1, w2, b2)

    out = neuron_forward(x, params)
    jax.block_until_ready(out)
    ref = _reference(x, w1, b1, w2, b2)
    assert out.shape == (B, O)
    # bf16 matmul operands with f32 accumulation -> loosened tolerance vs the
    # full-f32 reference.
    assert jnp.allclose(out, ref, atol=5e-2, rtol=5e-2), "mismatch vs reference"

    # Ragged batch: exercises the bf16 pad + trailing batch-slice branch.
    x2 = jax.random.normal(kx, (50, IN), dtype=jnp.float32)
    out2 = neuron_forward(x2, params)
    jax.block_until_ready(out2)
    ref2 = _reference(x2, w1, b1, w2, b2)
    assert out2.shape == (50, O)
    assert jnp.allclose(out2, ref2, atol=5e-2, rtol=5e-2), "mismatch (ragged batch)"

    print("KERNEL_OK")
</pallas_src>

<mosaic_0001>
module attributes {stable_mosaic.version = 11 : i64} {
  func.func @_mlp_kernel(%arg0: i32, %arg1: memref<256x32xf32, #tpu.memory_space<vmem>>, %arg2: memref<32x128xbf16, #tpu.memory_space<vmem>>, %arg3: memref<1x128xf32, #tpu.memory_space<vmem>>, %arg4: memref<128x16xbf16, #tpu.memory_space<vmem>>, %arg5: memref<1x16xf32, #tpu.memory_space<vmem>>, %arg6: memref<256x16xf32, #tpu.memory_space<vmem>>) attributes {dimension_semantics = [#tpu.dimension_semantics<parallel>], iteration_bounds = array<i64: 1>, scalar_prefetch = 0 : i64, scratch_operands = 0 : i64, tpu.core_type = #tpu.core_type<tc>, window_params = [{transform_indices = @transform_0, window_bounds = array<i64: 256, 32>}, {pipeline_mode = #tpu.pipeline_mode<synchronous>, transform_indices = @transform_1, window_bounds = array<i64: 32, 128>}, {pipeline_mode = #tpu.pipeline_mode<synchronous>, transform_indices = @transform_2, window_bounds = array<i64: 1, 128>}, {pipeline_mode = #tpu.pipeline_mode<synchronous>, transform_indices = @transform_3, window_bounds = array<i64: 128, 16>}, {pipeline_mode = #tpu.pipeline_mode<synchronous>, transform_indices = @transform_4, window_bounds = array<i64: 1, 16>}, {transform_indices = @transform_5, window_bounds = array<i64: 256, 16>}]} {
    %c0 = arith.constant 0 : index
    %c0_0 = arith.constant 0 : index
    %0 = vector.load %arg1[%c0, %c0_0] : memref<256x32xf32, #tpu.memory_space<vmem>>, vector<256x32xf32>
    %1 = arith.truncf %0 : vector<256x32xf32> to vector<256x32xbf16>
    %c0_1 = arith.constant 0 : index
    %c0_2 = arith.constant 0 : index
    %2 = vector.load %arg2[%c0_1, %c0_2] : memref<32x128xbf16, #tpu.memory_space<vmem>>, vector<32x128xbf16>
    %cst = arith.constant dense<0.000000e+00> : vector<256x128xf32>
    %3 = tpu.matmul %1, %2, %cst {dimension_numbers = #tpu.dot_dimension_numbers<[1], [0], [0], [1], [0, 0, 1, 1], [], []>} : vector<256x32xbf16>, vector<32x128xbf16>, vector<256x128xf32> -> vector<256x128xf32>
    %c0_3 = arith.constant 0 : index
    %c0_4 = arith.constant 0 : index
    %4 = vector.load %arg3[%c0_3, %c0_4] : memref<1x128xf32, #tpu.memory_space<vmem>>, vector<1x128xf32>
    %5 = vector.broadcast %4 : vector<1x128xf32> to vector<256x128xf32>
    %6 = arith.addf %3, %5 : vector<256x128xf32>
    %cst_5 = arith.constant 0.000000e+00 : f32
    %7 = vector.broadcast %cst_5 : f32 to vector<256x128xf32>
    %8 = arith.maximumf %6, %7 : vector<256x128xf32>
    %9 = arith.truncf %8 : vector<256x128xf32> to vector<256x128xbf16>
    %c0_6 = arith.constant 0 : index
    %c0_7 = arith.constant 0 : index
    %10 = vector.load %arg4[%c0_6, %c0_7] : memref<128x16xbf16, #tpu.memory_space<vmem>>, vector<128x16xbf16>
    %cst_8 = arith.constant dense<0.000000e+00> : vector<256x16xf32>
    %11 = tpu.matmul %9, %10, %cst_8 {dimension_numbers = #tpu.dot_dimension_numbers<[1], [0], [0], [1], [0, 0, 1, 1], [], []>} : vector<256x128xbf16>, vector<128x16xbf16>, vector<256x16xf32> -> vector<256x16xf32>
    %c0_9 = arith.constant 0 : index
    %c0_10 = arith.constant 0 : index
    %12 = vector.load %arg5[%c0_9, %c0_10] : memref<1x16xf32, #tpu.memory_space<vmem>>, vector<1x16xf32>
    %13 = vector.broadcast %12 : vector<1x16xf32> to vector<256x16xf32>
    %14 = arith.addf %11, %13 : vector<256x16xf32>
    %c0_11 = arith.constant 0 : index
    %c0_12 = arith.constant 0 : index
    %15 = vector.load %arg6[%c0_11, %c0_12] : memref<256x16xf32, #tpu.memory_space<vmem>>, vector<256x16xf32>
    tpu.vector_store %arg6[%c0_11, %c0_12], %14 {strides = array<i32>} : memref<256x16xf32, #tpu.memory_space<vmem>>, vector<256x16xf32>,
    return
  }
  func.func @transform_0(%arg0: i32) -> (i32, i32) {
    %c0_i32 = arith.constant 0 : i32
    %c0_i32_0 = arith.constant 0 : i32
    return %arg0, %c0_i32 : i32, i32
  }
  func.func @transform_1(%arg0: i32) -> (i32, i32) {
    %c0_i32 = arith.constant 0 : i32
    %c0_i32_0 = arith.constant 0 : i32
    %c0_i32_1 = arith.constant 0 : i32
    return %c0_i32, %c0_i32_0 : i32, i32
  }
  func.func @transform_2(%arg0: i32) -> (i32, i32) {
    %c0_i32 = arith.constant 0 : i32
    %c0_i32_0 = arith.constant 0 : i32
    %c0_i32_1 = arith.constant 0 : i32
    return %c0_i32, %c0_i32_0 : i32, i32
  }
  func.func @transform_3(%arg0: i32) -> (i32, i32) {
    %c0_i32 = arith.constant 0 : i32
    %c0_i32_0 = arith.constant 0 : i32
    %c0_i32_1 = arith.constant 0 : i32
    return %c0_i32, %c0_i32_0 : i32, i32
  }
  func.func @transform_4(%arg0: i32) -> (i32, i32) {
    %c0_i32 = arith.constant 0 : i32
    %c0_i32_0 = arith.constant 0 : i32
    %c0_i32_1 = arith.constant 0 : i32
    return %c0_i32, %c0_i32_0 : i32, i32
  }
  func.func @transform_5(%arg0: i32) -> (i32, i32) {
    %c0_i32 = arith.constant 0 : i32
    %c0_i32_0 = arith.constant 0 : i32
    return %arg0, %c0_i32 : i32, i32
  }
}

</mosaic_0001>

<llo_original>
// kernel: _neuron_forward_impl.1
$region0: #{_neuron_forward_impl.1}
  #allocation0 [shape = 'u32[]', space=smem, size = 0x4, offset = 0x4, fixed_abs, tag = 'smem constant byte address 0x4 - core index']
  #allocation1 [shape = 'u32[144,128]{1,0:T(1,128)}', space=vmem, size = 0x12000, scoped, tag = 'internal scratch']
  %s0 = inlined_call_operand.vmem [shape: f32[256,32], index: 0, kind: input, shape index: {}]
  %s1 = inlined_call_operand.vmem [shape: bf16[32,128], index: 1, kind: input, shape index: {}]
  %s2 = inlined_call_operand.vmem [shape: f32[1,128], index: 2, kind: input, shape index: {}]
  %s3 = inlined_call_operand.vmem [shape: bf16[128,16], index: 3, kind: input, shape index: {}]
  %s4 = inlined_call_operand.vmem [shape: f32[1,16], index: 4, kind: input, shape index: {}]
  %s5 = inlined_call_operand.vmem [shape: f32[256,16], index: 5, kind: output, shape index: {}]
  %s6 = sld [smem:[#allocation0]]
  $region30: #{_neuron_forward_impl.1} parent=0
    _
  %s8 = ssub.s32 1, %s6
  %s9 = scalar_select 0, %s8, %s6
  // Predicated region
  $region2: #{_neuron_forward_impl.1} parent=0 // pred_check
    _
  $region3: #{_neuron_forward_impl.1} parent=0 // pred_check_branch
    %11 = sbr.rel (0) target = $region5
  $region4: #{_neuron_forward_impl.1} parent=0 // pred_region
    _
  $region5: #{_neuron_forward_impl.1} parent=0 // pred_fallthru
    _
  // Predicated region
  $region6: #{_neuron_forward_impl.1} parent=0 // pred_check
    _
  $region7: #{_neuron_forward_impl.1} parent=0 // pred_check_branch
    %13 = sbr.rel (0) target = $region9
  $region8: #{_neuron_forward_impl.1} parent=0 // pred_region
    _
  $region9: #{_neuron_forward_impl.1} parent=0 // pred_fallthru
    _
  // Predicated region
  $region10: #{_neuron_forward_impl.1} parent=0 // pred_check
    _
  $region11: #{_neuron_forward_impl.1} parent=0 // pred_check_branch
    %15 = sbr.rel (0) target = $region13
  $region12: #{_neuron_forward_impl.1} parent=0 // pred_region
    _
  $region13: #{_neuron_forward_impl.1} parent=0 // pred_fallthru
    _
  // Predicated region
  $region14: #{_neuron_forward_impl.1} parent=0 // pred_check
    _
  $region15: #{_neuron_forward_impl.1} parent=0 // pred_check_branch
    %17 = sbr.rel (0) target = $region17
  $region16: #{_neuron_forward_impl.1} parent=0 // pred_region
    _
  $region17: #{_neuron_forward_impl.1} parent=0 // pred_fallthru
    _
  // Predicated region
  $region18: #{_neuron_forward_impl.1} parent=0 // pred_check
    _
  $region19: #{_neuron_forward_impl.1} parent=0 // pred_check_branch
    %19 = sbr.rel (0) target = $region21
  $region20: #{_neuron_forward_impl.1} parent=0 // pred_region
    _
  $region21: #{_neuron_forward_impl.1} parent=0 // pred_fallthru
    _
  %v21 = vld [vmem:[%s0] sm:$0xff]
  %v22 = vld [vmem:[%s0 + $0x8] sm:$0xff]
  %v23 = vld [vmem:[%s0 + $0x10] sm:$0xff]
  %v24 = vld [vmem:[%s0 + $0x18] sm:$0xff]
  %v25 = vld [vmem:[%s0 + $0x20] sm:$0xff]
  %v26 = vld [vmem:[%s0 + $0x28] sm:$0xff]
  %v27 = vld [vmem:[%s0 + $0x30] sm:$0xff]
  %v28 = vld [vmem:[%s0 + $0x38] sm:$0xff]
  %v29 = vld [vmem:[%s0 + $0x40] sm:$0xff]
  %v30 = vld [vmem:[%s0 + $0x48] sm:$0xff]
  %v31 = vld [vmem:[%s0 + $0x50] sm:$0xff]
  %v32 = vld [vmem:[%s0 + $0x58] sm:$0xff]
  %v33 = vld [vmem:[%s0 + $0x60] sm:$0xff]
  %v34 = vld [vmem:[%s0 + $0x68] sm:$0xff]
  %v35 = vld [vmem:[%s0 + $0x70] sm:$0xff]
  %v36 = vld [vmem:[%s0 + $0x78] sm:$0xff]
  %v37 = vld [vmem:[%s0 + $0x80] sm:$0xff]
  %v38 = vld [vmem:[%s0 + $0x88] sm:$0xff]
  %v39 = vld [vmem:[%s0 + $0x90] sm:$0xff]
  %v40 = vld [vmem:[%s0 + $0x98] sm:$0xff]
  %v41 = vld [vmem:[%s0 + $0xa0] sm:$0xff]
  %v42 = vld [vmem:[%s0 + $0xa8] sm:$0xff]
  %v43 = vld [vmem:[%s0 + $0xb0] sm:$0xff]
  %v44 = vld [vmem:[%s0 + $0xb8] sm:$0xff]
  %v45 = vld [vmem:[%s0 + $0xc0] sm:$0xff]
  %v46 = vld [vmem:[%s0 + $0xc8] sm:$0xff]
  %v47 = vld [vmem:[%s0 + $0xd0] sm:$0xff]
  %v48 = vld [vmem:[%s0 + $0xd8] sm:$0xff]
  %v49 = vld [vmem:[%s0 + $0xe0] sm:$0xff]
  %v50 = vld [vmem:[%s0 + $0xe8] sm:$0xff]
  %v51 = vld [vmem:[%s0 + $0xf0] sm:$0xff]
  %v52 = vld [vmem:[%s0 + $0xf8] sm:$0xff]
  %v53 = vpack.c.bf16 %v22, %v21
  %v54 = vpack.c.bf16 %v24, %v23
  %v55 = vpack.c.bf16 %v26, %v25
  %v56 = vpack.c.bf16 %v28, %v27
  %v57 = vpack.c.bf16 %v30, %v29
  %v58 = vpack.c.bf16 %v32, %v31
  %v59 = vpack.c.bf16 %v34, %v33
  %v60 = vpack.c.bf16 %v36, %v35
  %v61 = vpack.c.bf16 %v38, %v37
  %v62 = vpack.c.bf16 %v40, %v39
  %v63 = vpack.c.bf16 %v42, %v41
  %v64 = vpack.c.bf16 %v44, %v43
  %v65 = vpack.c.bf16 %v46, %v45
  %v66 = vpack.c.bf16 %v48, %v47
  %v67 = vpack.c.bf16 %v50, %v49
  %v68 = vpack.c.bf16 %v52, %v51
  %v69 = vld [vmem:[%s1] sm:$0xf]
  %v70 = vld [vmem:[%s1 + $0x4] sm:$0xf]
  %v71 = vld [vmem:[%s1 + $0x8] sm:$0xf]
  %v72 = vld [vmem:[%s1 + $0xc] sm:$0xf]
  %v73 = vld [vmem:[%s2] sm:$0x1]
  %v75 = vlaneseq
  %v76 = vshrl.u32 %v75, 7
  %v77 = vsub.s32 0, %v76
  %v78 = vrot.slane %v73, %v77
  %v84 = vunpack.c.l.b16 %v69
  %v85 = vunpack.c.l.b16 %v70
  %v86 = vunpack.c.l.b16 %v71
  %v87 = vunpack.c.l.b16 %v72
  %v88 = vpack.c.b16 %v85, %v84
  %v89 = vpack.c.b16 %v87, %v86
  %vm92 = vcmask 261120
  %v94 = vsel %vm92, %v53, 0
  %v97 = vsel %vm92, %v54, 0
  %v100 = vsel %vm92, %v55, 0
  %v103 = vsel %vm92, %v56, 0
  %v106 = vsel %vm92, %v57, 0
  %v109 = vsel %vm92, %v58, 0
  %v112 = vsel %vm92, %v59, 0
  %v115 = vsel %vm92, %v60, 0
  %v118 = vsel %vm92, %v61, 0
  %v121 = vsel %vm92, %v62, 0
  %v124 = vsel %vm92, %v63, 0
  %v127 = vsel %vm92, %v64, 0
  %v130 = vsel %vm92, %v65, 0
  %v133 = vsel %vm92, %v66, 0
  %v136 = vsel %vm92, %v67, 0
  %v139 = vsel %vm92, %v68, 0
  %141 = vmatprep.subr.bf16.mxu0 0
  %142 = vmatpush1.bf16.msra.mxu0 %v88
  %143 = vmatprep.subr.bf16.mxu0 0
  %144 = vmatpush1.bf16.msra.mxu0 %v89
  %145 = vmatprep.subr.bf16.mxu0 0
  %146 = vmatpush1.bf16.msra.mxu0 0
  %147 = vmatprep.subr.bf16.mxu0 0
  %148 = vmatpush1.bf16.msra.mxu0 0
  %149 = vmatprep.subr.bf16.mxu0 0
  %150 = vmatpush1.bf16.msra.mxu0 0
  %151 = vmatprep.subr.bf16.mxu0 0
  %152 = vmatpush1.bf16.msra.mxu0 0
  %153 = vmatprep.subr.bf16.mxu0 0
  %154 = vmatpush1.bf16.msra.mxu0 0
  %155 = vmatprep.subr.bf16.mxu0 0
  %156 = vmatpush1.bf16.msra.mxu0 0
  %157 = vmatprep.subr.bf16.mxu0 0
  %158 = vmatpush1.bf16.msra.mxu0 0
  %159 = vmatprep.subr.bf16.mxu0 0
  %160 = vmatpush1.bf16.msra.mxu0 0
  %161 = vmatprep.subr.bf16.mxu0 0
  %162 = vmatpush1.bf16.msra.mxu0 0
  %163 = vmatprep.subr.bf16.mxu0 0
  %164 = vmatpush1.bf16.msra.mxu0 0
  %165 = vmatprep.subr.bf16.mxu0 0
  %166 = vmatpush1.bf16.msra.mxu0 0
  %167 = vmatprep.subr.bf16.mxu0 0
  %168 = vmatpush1.bf16.msra.mxu0 0
  %169 = vmatprep.subr.bf16.mxu0 0
  %170 = vmatpush1.bf16.msra.mxu0 0
  %171 = vmatprep.subr.bf16.mxu0 0
  %172 = vmatpush1.bf16.msra.mxu0 0
  %173 = vmatprep.mubr.bf16.mxu0 0
  %174 = vmatmul.mubr.bf16.gmra.mrb[0].mxu0 %v94
  %v175 = vpop.f32.mrb[0].mxu0
  %v176 = vadd.f32 %v78, %v175
  %v177 = vpop.f32.mrb[0].mxu0
  %v178 = vpop.f32.mrb[0].mxu0
  %v179 = vadd.f32 %v78, %v178
  %v180 = vpop.f32.mrb[0].mxu0
  %181 = vmatprep.mubr.bf16.mxu0 0
  %182 = vmatmul.mubr.bf16.gmra.mrb[0].mxu0 %v97
  %v183 = vpop.f32.mrb[0].mxu0
  %v184 = vadd.f32 %v78, %v183
  %v185 = vpop.f32.mrb[0].mxu0
  %v186 = vpop.f32.mrb[0].mxu0
  %v187 = vadd.f32 %v78, %v186
  %v188 = vpop.f32.mrb[0].mxu0
  %189 = vmatprep.mubr.bf16.mxu0 0
  %190 = vmatmul.mubr.bf16.gmra.mrb[0].mxu0 %v100
  %v191 = vpop.f32.mrb[0].mxu0
  %v192 = vadd.f32 %v78, %v191
  %v193 = vpop.f32.mrb[0].mxu0
  %v194 = vpop.f32.mrb[0].mxu0
  %v195 = vadd.f32 %v78, %v194
  %v196 = vpop.f32.mrb[0].mxu0
  %197 = vmatprep.mubr.bf16.mxu0 0
  %198 = vmatmul.mubr.bf16.gmra.mrb[0].mxu0 %v103
  %v199 = vpop.f32.mrb[0].mxu0
  %v200 = vadd.f32 %v78, %v199
  %v201 = vpop.f32.mrb[0].mxu0
  %v202 = vpop.f32.mrb[0].mxu0
  %v203 = vadd.f32 %v78, %v202
  %v204 = vpop.f32.mrb[0].mxu0
  %205 = vmatprep.mubr.bf16.mxu0 0
  %206 = vmatmul.mubr.bf16.gmra.mrb[0].mxu0 %v106
  %v207 = vpop.f32.mrb[0].mxu0
  %v208 = vadd.f32 %v78, %v207
  %v209 = vpop.f32.mrb[0].mxu0
  %v210 = vpop.f32.mrb[0].mxu0
  %v211 = vadd.f32 %v78, %v210
  %v212 = vpop.f32.mrb[0].mxu0
  %213 = vmatprep.mubr.bf16.mxu0 0
  %214 = vmatmul.mubr.bf16.gmra.mrb[0].mxu0 %v109
  %v215 = vpop.f32.mrb[0].mxu0
  %v216 = vadd.f32 %v78, %v215
  %v217 = vpop.f32.mrb[0].mxu0
  %v218 = vpop.f32.mrb[0].mxu0
  %v219 = vadd.f32 %v78, %v218
  %v220 = vpop.f32.mrb[0].mxu0
  %221 = vmatprep.mubr.bf16.mxu0 0
  %222 = vmatmul.mubr.bf16.gmra.mrb[0].mxu0 %v112
  %v223 = vpop.f32.mrb[0].mxu0
  %v224 = vadd.f32 %v78, %v223
  %v225 = vpop.f32.mrb[0].mxu0
  %v226 = vpop.f32.mrb[0].mxu0
  %v227 = vadd.f32 %v78, %v226
  %v228 = vpop.f32.mrb[0].mxu0
  %229 = vmatprep.mubr.bf16.mxu0 0
  %230 = vmatmul.mubr.bf16.gmra.mrb[0].mxu0 %v115
  %v231 = vpop.f32.mrb[0].mxu0
  %v232 = vadd.f32 %v78, %v231
  %v233 = vpop.f32.mrb[0].mxu0
  %v234 = vpop.f32.mrb[0].mxu0
  %v235 = vadd.f32 %v78, %v234
  %v236 = vpop.f32.mrb[0].mxu0
  %237 = vmatprep.mubr.bf16.mxu0 0
  %238 = vmatmul.mubr.bf16.gmra.mrb[0].mxu0 %v118
  %v239 = vpop.f32.mrb[0].mxu0
  %v240 = vadd.f32 %v78, %v239
  %v241 = vpop.f32.mrb[0].mxu0
  %v242 = vpop.f32.mrb[0].mxu0
  %v243 = vadd.f32 %v78, %v242
  %v244 = vpop.f32.mrb[0].mxu0
  %245 = vmatprep.mubr.bf16.mxu0 0
  %246 = vmatmul.mubr.bf16.gmra.mrb[0].mxu0 %v121
  %v247 = vpop.f32.mrb[0].mxu0
  %v248 = vadd.f32 %v78, %v247
  %v249 = vpop.f32.mrb[0].mxu0
  %v250 = vpop.f32.mrb[0].mxu0
  %v251 = vadd.f32 %v78, %v250
  %v252 = vpop.f32.mrb[0].mxu0
  %253 = vmatprep.mubr.bf16.mxu0 0
  %254 = vmatmul.mubr.bf16.gmra.mrb[0].mxu0 %v124
  %v255 = vpop.f32.mrb[0].mxu0
  %v256 = vadd.f32 %v78, %v255
  %v257 = vpop.f32.mrb[0].mxu0
  %v258 = vpop.f32.mrb[0].mxu0
  %v259 = vadd.f32 %v78, %v258
  %v260 = vpop.f32.mrb[0].mxu0
  %261 = vmatprep.mubr.bf16.mxu0 0
  %262 = vmatmul.mubr.bf16.gmra.mrb[0].mxu0 %v127
  %v263 = vpop.f32.mrb[0].mxu0
  %v264 = vadd.f32 %v78, %v263
  %v265 = vpop.f32.mrb[0].mxu0
  %v266 = vpop.f32.mrb[0].mxu0
  %v267 = vadd.f32 %v78, %v266
  %v268 = vpop.f32.mrb[0].mxu0
  %269 = vmatprep.mubr.bf16.mxu0 0
  %270 = vmatmul.mubr.bf16.gmra.mrb[0].mxu0 %v130
  %v271 = vpop.f32.mrb[0].mxu0
  %v272 = vadd.f32 %v78, %v271
  %v273 = vpop.f32.mrb[0].mxu0
  %v274 = vpop.f32.mrb[0].mxu0
  %v275 = vadd.f32 %v78, %v274
  %v276 = vpop.f32.mrb[0].mxu0
  %277 = vmatprep.mubr.bf16.mxu0 0
  %278 = vmatmul.mubr.bf16.gmra.mrb[0].mxu0 %v133
  %v279 = vpop.f32.mrb[0].mxu0
  %v280 = vadd.f32 %v78, %v279
  %v281 = vpop.f32.mrb[0].mxu0
  %v282 = vpop.f32.mrb[0].mxu0
  %v283 = vadd.f32 %v78, %v282
  %v284 = vpop.f32.mrb[0].mxu0
  %285 = vmatprep.mubr.bf16.mxu0 0
  %286 = vmatmul.mubr.bf16.gmra.mrb[0].mxu0 %v136
  %v287 = vpop.f32.mrb[0].mxu0
  %v288 = vadd.f32 %v78, %v287
  %v289 = vpop.f32.mrb[0].mxu0
  %v290 = vpop.f32.mrb[0].mxu0
  %v291 = vadd.f32 %v78, %v290
  %v292 = vpop.f32.mrb[0].mxu0
  %293 = vmatprep.mubr.bf16.mxu0 0
  %294 = vmatmul.mubr.bf16.gmra.mrb[0].mxu0 %v139
  %v295 = vpop.f32.mrb[0].mxu0
  %v296 = vadd.f32 %v78, %v295
  %v297 = vpop.f32.mrb[0].mxu0
  %v298 = vpop.f32.mrb[0].mxu0
  %v299 = vadd.f32 %v78, %v298
  %v300 = vpop.f32.mrb[0].mxu0
  %301 = vdwg.mxu0
  %v302 = vmax.f32 %v176, 0.0
  %v303 = vmax.f32 %v179, 0.0
  %v304 = vmax.f32 %v184, 0.0
  %v305 = vmax.f32 %v187, 0.0
  %v306 = vmax.f32 %v192, 0.0
  %v307 = vmax.f32 %v195, 0.0
  %v308 = vmax.f32 %v200, 0.0
  %v309 = vmax.f32 %v203, 0.0
  %v310 = vmax.f32 %v208, 0.0
  %v311 = vmax.f32 %v211, 0.0
  %v312 = vmax.f32 %v216, 0.0
  %v313 = vmax.f32 %v219, 0.0
  %v314 = vmax.f32 %v224, 0.0
  %v315 = vmax.f32 %v227, 0.0
  %v316 = vmax.f32 %v232, 0.0
  %v317 = vmax.f32 %v235, 0.0
  %v318 = vmax.f32 %v240, 0.0
  %v319 = vmax.f32 %v243, 0.0
  %v320 = vmax.f32 %v248, 0.0
  %v321 = vmax.f32 %v251, 0.0
  %v322 = vmax.f32 %v256, 0.0
  %v323 = vmax.f32 %v259, 0.0
  %v324 = vmax.f32 %v264, 0.0
  %v325 = vmax.f32 %v267, 0.0
  %v326 = vmax.f32 %v272, 0.0
  %v327 = vmax.f32 %v275, 0.0
  %v328 = vmax.f32 %v280, 0.0
  %v329 = vmax.f32 %v283, 0.0
  %v330 = vmax.f32 %v288, 0.0
  %v331 = vmax.f32 %v291, 0.0
  %v332 = vmax.f32 %v296, 0.0
  %v333 = vmax.f32 %v299, 0.0
  %v334 = vpack.c.bf16 %v303, %v302
  %v335 = vpack.c.bf16 %v305, %v304
  %v336 = vpack.c.bf16 %v307, %v306
  %v337 = vpack.c.bf16 %v309, %v308
  %v338 = vpack.c.bf16 %v311, %v310
  %v339 = vpack.c.bf16 %v313, %v312
  %v340 = vpack.c.bf16 %v315, %v314
  %v341 = vpack.c.bf16 %v317, %v316
  %v342 = vpack.c.bf16 %v319, %v318
  %v343 = vpack.c.bf16 %v321, %v320
  %v344 = vpack.c.bf16 %v323, %v322
  %v345 = vpack.c.bf16 %v325, %v324
  %v346 = vpack.c.bf16 %v327, %v326
  %v347 = vpack.c.bf16 %v329, %v328
  %v348 = vpack.c.bf16 %v331, %v330
  %v349 = vpack.c.bf16 %v333, %v332
  %v350 = vld [vmem:[%s3] sm:$0xf]
  %v351 = vld [vmem:[%s3 + $0x4] sm:$0xf]
  %v352 = vld [vmem:[%s3 + $0x8] sm:$0xf]
  %v353 = vld [vmem:[%s3 + $0xc] sm:$0xf]
  %v354 = vld [vmem:[%s3 + $0x10] sm:$0xf]
  %v355 = vld [vmem:[%s3 + $0x14] sm:$0xf]
  %v356 = vld [vmem:[%s3 + $0x18] sm:$0xf]
  %v357 = vld [vmem:[%s3 + $0x1c] sm:$0xf]
  %v358 = vld [vmem:[%s3 + $0x20] sm:$0xf]
  %v359 = vld [vmem:[%s3 + $0x24] sm:$0xf]
  %v360 = vld [vmem:[%s3 + $0x28] sm:$0xf]
  %v361 = vld [vmem:[%s3 + $0x2c] sm:$0xf]
  %v362 = vld [vmem:[%s3 + $0x30] sm:$0xf]
  %v363 = vld [vmem:[%s3 + $0x34] sm:$0xf]
  %v364 = vld [vmem:[%s3 + $0x38] sm:$0xf]
  %v365 = vld [vmem:[%s3 + $0x3c] sm:$0xf]
  %v366 = vld [vmem:[%s4] sm:$0x1]
  %v368 = vlaneseq
  %v369 = vshrl.u32 %v368, 7
  %v370 = vsub.s32 0, %v369
  %v371 = vrot.slane %v366, %v370
  %v389 = vunpack.c.l.b16 %v350
  %v390 = vunpack.c.l.b16 %v351
  %v391 = vunpack.c.l.b16 %v352
  %v392 = vunpack.c.l.b16 %v353
  %v393 = vunpack.c.l.b16 %v354
  %v394 = vunpack.c.l.b16 %v355
  %v395 = vunpack.c.l.b16 %v356
  %v396 = vunpack.c.l.b16 %v357
  %v397 = vunpack.c.l.b16 %v358
  %v398 = vunpack.c.l.b16 %v359
  %v399 = vunpack.c.l.b16 %v360
  %v400 = vunpack.c.l.b16 %v361
  %v401 = vunpack.c.l.b16 %v362
  %v402 = vunpack.c.l.b16 %v363
  %v403 = vunpack.c.l.b16 %v364
  %v404 = vunpack.c.l.b16 %v365
  %v405 = vpack.c.b16 %v390, %v389
  %v406 = vpack.c.b16 %v392, %v391
  %v407 = vpack.c.b16 %v394, %v393
  %v408 = vpack.c.b16 %v396, %v395
  %v409 = vpack.c.b16 %v398, %v397
  %v410 = vpack.c.b16 %v400, %v399
  %v411 = vpack.c.b16 %v402, %v401
  %v412 = vpack.c.b16 %v404, %v403
  %421 = vmatprep.subr.bf16.mxu0 0
  %422 = vmatpush1.bf16.msra.mxu0 %v405
  %423 = vmatprep.subr.bf16.mxu0 0
  %424 = vmatpush1.bf16.msra.mxu0 %v406
  %425 = vmatprep.subr.bf16.mxu0 0
  %426 = vmatpush1.bf16.msra.mxu0 %v407
  %427 = vmatprep.subr.bf16.mxu0 0
  %428 = vmatpush1.bf16.msra.mxu0 %v408
  %429 = vmatprep.subr.bf16.mxu0 0
  %430 = vmatpush1.bf16.msra.mxu0 %v409
  %431 = vmatprep.subr.bf16.mxu0 0
  %432 = vmatpush1.bf16.msra.mxu0 %v410
  %433 = vmatprep.subr.bf16.mxu0 0
  %434 = vmatpush1.bf16.msra.mxu0 %v411
  %435 = vmatprep.subr.bf16.mxu0 0
  %436 = vmatpush1.bf16.msra.mxu0 %v412
  %437 = vmatprep.subr.bf16.mxu0 0
  %438 = vmatpush1.bf16.msra.mxu0 0
  %439 = vmatprep.subr.bf16.mxu0 0
  %440 = vmatpush1.bf16.msra.mxu0 0
  %441 = vmatprep.subr.bf16.mxu0 0
  %442 = vmatpush1.bf16.msra.mxu0 0
  %443 = vmatprep.subr.bf16.mxu0 0
  %444 = vmatpush1.bf16.msra.mxu0 0
  %445 = vmatprep.subr.bf16.mxu0 0
  %446 = vmatpush1.bf16.msra.mxu0 0
  %447 = vmatprep.subr.bf16.mxu0 0
  %448 = vmatpush1.bf16.msra.mxu0 0
  %449 = vmatprep.subr.bf16.mxu0 0
  %450 = vmatpush1.bf16.msra.mxu0 0
  %451 = vmatprep.subr.bf16.mxu0 0
  %452 = vmatpush1.bf16.msra.mxu0 0
  %453 = vmatprep.mubr.bf16.mxu0 0
  %454 = vmatmul.mubr.bf16.gmra.mrb[0].mxu0 %v334
  %v455 = vpop.f32.mrb[0].mxu0
  %v456 = vadd.f32 %v371, %v455
  %v457 = vpop.f32.mrb[0].mxu0
  %v458 = vpop.f32.mrb[0].mxu0
  %v459 = vadd.f32 %v371, %v458
  %v460 = vpop.f32.mrb[0].mxu0
  %461 = vmatprep.mubr.bf16.mxu0 0
  %462 = vmatmul.mubr.bf16.gmra.mrb[0].mxu0 %v335
  %v463 = vpop.f32.mrb[0].mxu0
  %v464 = vadd.f32 %v371, %v463
  %v465 = vpop.f32.mrb[0].mxu0
  %v466 = vpop.f32.mrb[0].mxu0
  %v467 = vadd.f32 %v371, %v466
  %v468 = vpop.f32.mrb[0].mxu0
  %469 = vmatprep.mubr.bf16.mxu0 0
  %470 = vmatmul.mubr.bf16.gmra.mrb[0].mxu0 %v336
  %v471 = vpop.f32.mrb[0].mxu0
  %v472 = vadd.f32 %v371, %v471
  %v473 = vpop.f32.mrb[0].mxu0
  %v474 = vpop.f32.mrb[0].mxu0
  %v475 = vadd.f32 %v371, %v474
  %v476 = vpop.f32.mrb[0].mxu0
  %477 = vmatprep.mubr.bf16.mxu0 0
  %478 = vmatmul.mubr.bf16.gmra.mrb[0].mxu0 %v337
  %v479 = vpop.f32.mrb[0].mxu0
  %v480 = vadd.f32 %v371, %v479
  %v481 = vpop.f32.mrb[0].mxu0
  %v482 = vpop.f32.mrb[0].mxu0
  %v483 = vadd.f32 %v371, %v482
  %v484 = vpop.f32.mrb[0].mxu0
  %485 = vmatprep.mubr.bf16.mxu0 0
  %486 = vmatmul.mubr.bf16.gmra.mrb[0].mxu0 %v338
  %v487 = vpop.f32.mrb[0].mxu0
  %v488 = vadd.f32 %v371, %v487
  %v489 = vpop.f32.mrb[0].mxu0
  %v490 = vpop.f32.mrb[0].mxu0
  %v491 = vadd.f32 %v371, %v490
  %v492 = vpop.f32.mrb[0].mxu0
  %493 = vmatprep.mubr.bf16.mxu0 0
  %494 = vmatmul.mubr.bf16.gmra.mrb[0].mxu0 %v339
  %v495 = vpop.f32.mrb[0].mxu0
  %v496 = vadd.f32 %v371, %v495
  %v497 = vpop.f32.mrb[0].mxu0
  %v498 = vpop.f32.mrb[0].mxu0
  %v499 = vadd.f32 %v371, %v498
  %v500 = vpop.f32.mrb[0].mxu0
  %501 = vmatprep.mubr.bf16.mxu0 0
  %502 = vmatmul.mubr.bf16.gmra.mrb[0].mxu0 %v340
  %v503 = vpop.f32.mrb[0].mxu0
  %v504 = vadd.f32 %v371, %v503
  %v505 = vpop.f32.mrb[0].mxu0
  %v506 = vpop.f32.mrb[0].mxu0
  %v507 = vadd.f32 %v371, %v506
  %v508 = vpop.f32.mrb[0].mxu0
  %509 = vmatprep.mubr.bf16.mxu0 0
  %510 = vmatmul.mubr.bf16.gmra.mrb[0].mxu0 %v341
  %v511 = vpop.f32.mrb[0].mxu0
  %v512 = vadd.f32 %v371, %v511
  %v513 = vpop.f32.mrb[0].mxu0
  %v514 = vpop.f32.mrb[0].mxu0
  %v515 = vadd.f32 %v371, %v514
  %v516 = vpop.f32.mrb[0].mxu0
  %517 = vmatprep.mubr.bf16.mxu0 0
  %518 = vmatmul.mubr.bf16.gmra.mrb[0].mxu0 %v342
  %v519 = vpop.f32.mrb[0].mxu0
  %v520 = vadd.f32 %v371, %v519
  %v521 = vpop.f32.mrb[0].mxu0
  %v522 = vpop.f32.mrb[0].mxu0
  %v523 = vadd.f32 %v371, %v522
  %v524 = vpop.f32.mrb[0].mxu0
  %525 = vmatprep.mubr.bf16.mxu0 0
  %526 = vmatmul.mubr.bf16.gmra.mrb[0].mxu0 %v343
  %v527 = vpop.f32.mrb[0].mxu0
  %v528 = vadd.f32 %v371, %v527
  %v529 = vpop.f32.mrb[0].mxu0
  %v530 = vpop.f32.mrb[0].mxu0
  %v531 = vadd.f32 %v371, %v530
  %v532 = vpop.f32.mrb[0].mxu0
  %533 = vmatprep.mubr.bf16.mxu0 0
  %534 = vmatmul.mubr.bf16.gmra.mrb[0].mxu0 %v344
  %v535 = vpop.f32.mrb[0].mxu0
  %v536 = vadd.f32 %v371, %v535
  %v537 = vpop.f32.mrb[0].mxu0
  %v538 = vpop.f32.mrb[0].mxu0
  %v539 = vadd.f32 %v371, %v538
  %v540 = vpop.f32.mrb[0].mxu0
  %541 = vmatprep.mubr.bf16.mxu0 0
  %542 = vmatmul.mubr.bf16.gmra.mrb[0].mxu0 %v345
  %v543 = vpop.f32.mrb[0].mxu0
  %v544 = vadd.f32 %v371, %v543
  %v545 = vpop.f32.mrb[0].mxu0
  %v546 = vpop.f32.mrb[0].mxu0
  %v547 = vadd.f32 %v371, %v546
  %v548 = vpop.f32.mrb[0].mxu0
  %549 = vmatprep.mubr.bf16.mxu0 0
  %550 = vmatmul.mubr.bf16.gmra.mrb[0].mxu0 %v346
  %v551 = vpop.f32.mrb[0].mxu0
  %v552 = vadd.f32 %v371, %v551
  %v553 = vpop.f32.mrb[0].mxu0
  %v554 = vpop.f32.mrb[0].mxu0
  %v555 = vadd.f32 %v371, %v554
  %v556 = vpop.f32.mrb[0].mxu0
  %557 = vmatprep.mubr.bf16.mxu0 0
  %558 = vmatmul.mubr.bf16.gmra.mrb[0].mxu0 %v347
  %v559 = vpop.f32.mrb[0].mxu0
  %v560 = vadd.f32 %v371, %v559
  %v561 = vpop.f32.mrb[0].mxu0
  %v562 = vpop.f32.mrb[0].mxu0
  %v563 = vadd.f32 %v371, %v562
  %v564 = vpop.f32.mrb[0].mxu0
  %565 = vmatprep.mubr.bf16.mxu0 0
  %566 = vmatmul.mubr.bf16.gmra.mrb[0].mxu0 %v348
  %v567 = vpop.f32.mrb[0].mxu0
  %v568 = vadd.f32 %v371, %v567
  %v569 = vpop.f32.mrb[0].mxu0
  %v570 = vpop.f32.mrb[0].mxu0
  %v571 = vadd.f32 %v371, %v570
  %v572 = vpop.f32.mrb[0].mxu0
  %573 = vmatprep.mubr.bf16.mxu0 0
  %574 = vmatmul.mubr.bf16.gmra.mrb[0].mxu0 %v349
  %v575 = vpop.f32.mrb[0].mxu0
  %v576 = vadd.f32 %v371, %v575
  %v577 = vpop.f32.mrb[0].mxu0
  %v578 = vpop.f32.mrb[0].mxu0
  %v579 = vadd.f32 %v371, %v578
  %v580 = vpop.f32.mrb[0].mxu0
  %581 = vdwg.mxu0
  %vm582 = vcmask 130048
  %583 = vst.msk [vmem:[%s5] sm:$0xff] %vm582, %v456
  %584 = vst.msk [vmem:[%s5 + $0x8] sm:$0xff] %vm582, %v459
  %585 = vst.msk [vmem:[%s5 + $0x10] sm:$0xff] %vm582, %v464
  %586 = vst.msk [vmem:[%s5 + $0x18] sm:$0xff] %vm582, %v467
  %587 = vst.msk [vmem:[%s5 + $0x20] sm:$0xff] %vm582, %v472
  %588 = vst.msk [vmem:[%s5 + $0x28] sm:$0xff] %vm582, %v475
  %589 = vst.msk [vmem:[%s5 + $0x30] sm:$0xff] %vm582, %v480
  %590 = vst.msk [vmem:[%s5 + $0x38] sm:$0xff] %vm582, %v483
  %591 = vst.msk [vmem:[%s5 + $0x40] sm:$0xff] %vm582, %v488
  %592 = vst.msk [vmem:[%s5 + $0x48] sm:$0xff] %vm582, %v491
  %593 = vst.msk [vmem:[%s5 + $0x50] sm:$0xff] %vm582, %v496
  %594 = vst.msk [vmem:[%s5 + $0x58] sm:$0xff] %vm582, %v499
  %595 = vst.msk [vmem:[%s5 + $0x60] sm:$0xff] %vm582, %v504
  %596 = vst.msk [vmem:[%s5 + $0x68] sm:$0xff] %vm582, %v507
  %597 = vst.msk [vmem:[%s5 + $0x70] sm:$0xff] %vm582, %v512
  %598 = vst.msk [vmem:[%s5 + $0x78] sm:$0xff] %vm582, %v515
  %599 = vst.msk [vmem:[%s5 + $0x80] sm:$0xff] %vm582, %v520
  %600 = vst.msk [vmem:[%s5 + $0x88] sm:$0xff] %vm582, %v523
  %601 = vst.msk [vmem:[%s5 + $0x90] sm:$0xff] %vm582, %v528
  %602 = vst.msk [vmem:[%s5 + $0x98] sm:$0xff] %vm582, %v531
  %603 = vst.msk [vmem:[%s5 + $0xa0] sm:$0xff] %vm582, %v536
  %604 = vst.msk [vmem:[%s5 + $0xa8] sm:$0xff] %vm582, %v539
  %605 = vst.msk [vmem:[%s5 + $0xb0] sm:$0xff] %vm582, %v544
  %606 = vst.msk [vmem:[%s5 + $0xb8] sm:$0xff] %vm582, %v547
  %607 = vst.msk [vmem:[%s5 + $0xc0] sm:$0xff] %vm582, %v552
  %608 = vst.msk [vmem:[%s5 + $0xc8] sm:$0xff] %vm582, %v555
  %609 = vst.msk [vmem:[%s5 + $0xd0] sm:$0xff] %vm582, %v560
  %610 = vst.msk [vmem:[%s5 + $0xd8] sm:$0xff] %vm582, %v563
  %611 = vst.msk [vmem:[%s5 + $0xe0] sm:$0xff] %vm582, %v568
  %612 = vst.msk [vmem:[%s5 + $0xe8] sm:$0xff] %vm582, %v571
  %613 = vst.msk [vmem:[%s5 + $0xf0] sm:$0xff] %vm582, %v576
  %614 = vst.msk [vmem:[%s5 + $0xf8] sm:$0xff] %vm582, %v579
  // Predicated region
  $region22: #{_neuron_forward_impl.1} parent=0 // pred_check
    _
  $region23: #{_neuron_forward_impl.1} parent=0 // pred_check_branch
    %616 = sbr.rel (0) target = $region25
  $region24: #{_neuron_forward_impl.1} parent=0 // pred_region
    _
  $region25: #{_neuron_forward_impl.1} parent=0 // pred_fallthru
    _
  // Predicated region
  $region26: #{_neuron_forward_impl.1} parent=0 // pred_check
    _
  $region27: #{_neuron_forward_impl.1} parent=0 // pred_check_branch
    %618 = sbr.rel (0) target = $region29
  $region28: #{_neuron_forward_impl.1} parent=0 // pred_region
    _
  $region29: #{_neuron_forward_impl.1} parent=0 // pred_fallthru
    _

</llo_original>
